<compile_context>
chip_gen: v5e
topology: v5e:2x2
jax: 0.10.0
libtpu: 0.0.40
codegen_flags: <defaults>
</compile_context>

<pallas_src>
import numpy as np
import jax
import jax.numpy as jnp
from jax.experimental import pallas as pl
from jax.experimental.pallas import tpu as pltpu


def _vmem_cap_bytes():
    try:
        return int(pltpu.get_tpu_info().vmem_capacity_bytes)
    except Exception:
        return 64 << 20  # conservative fallback (v7x-sized)


def make_dino_kernel(ncrops, batch, crops_per_step, inv_teacher_temp,
                     student_temp, center_momentum):
    G = crops_per_step
    num_steps = ncrops // G
    inv_t = np.float32(inv_teacher_temp)
    inv_s = np.float32(1.0 / student_temp)
    inv_b = np.float32(1.0 / batch)
    inv_rows = np.float32(1.0 / (2 * batch))
    mom = np.float32(center_momentum)
    one_m = np.float32(1.0 - center_momentum)

    def kernel(student_ref, teacher_ref, center_ref, loss_ref, new_center_ref,
               q_ref):
        step = pl.program_id(0)

        def prep():
            # Teacher softmax -> persistent VMEM scratch q[0], q[1]; center EMA.
            c32 = center_ref[...].astype(jnp.float32)            # (1, dim)
            col_sum = jnp.zeros_like(c32)
            for i in range(2):
                ti = teacher_ref[i].astype(jnp.float32)          # (batch, dim)
                col_sum = col_sum + jnp.sum(ti, axis=0, keepdims=True)
                z = (ti - c32) * inv_t
                z = z - jnp.max(z, axis=-1, keepdims=True)
                e = jnp.exp(z)
                q_ref[i] = e * pl.reciprocal(                    # exact recip
                    jnp.sum(e, axis=-1, keepdims=True))
            # TODO(synk): cross-device all_reduce of batch_center not
            # implemented (single device / world_size == 1): local mean only.
            new_center_ref[...] = c32 * mom + col_sum * (inv_rows * one_m)
            loss_ref[...] = jnp.zeros_like(loss_ref)

        if num_steps == 1:
            prep()
        else:
            @pl.when(step == 0)
            def _():
                prep()

        def chunk_term(qi, sm, log_l):
            # -mean_rows( sum_d qi * logp ), with logp = sm - log_l (never built)
            d = jnp.sum(qi * sm, axis=-1, keepdims=True)          # (batch, 1)
            qs = jnp.sum(qi, axis=-1, keepdims=True)              # (batch, 1)
            return -jnp.sum(d - qs * log_l) * inv_b               # scalar

        q0 = q_ref[0]
        q1 = q_ref[1]
        acc = jnp.float32(0.0)
        for g in range(G):
            s = student_ref[g].astype(jnp.float32) * inv_s        # (batch, dim)
            sm = s - jnp.max(s, axis=-1, keepdims=True)
            log_l = jnp.log(jnp.sum(jnp.exp(sm), axis=-1, keepdims=True))
            if num_steps == 1:
                v = g                                             # static crop id
                if v == 0:
                    acc = acc + chunk_term(q1, sm, log_l)
                elif v == 1:
                    acc = acc + chunk_term(q0, sm, log_l)
                else:
                    acc = (acc + chunk_term(q0, sm, log_l)
                               + chunk_term(q1, sm, log_l))
            else:
                v = step * G + g                                  # traced crop id
                t0 = chunk_term(q0, sm, log_l)
                t1 = chunk_term(q1, sm, log_l)
                w0 = (v != 0).astype(jnp.float32)                 # crop 0 skips q0
                w1 = (v != 1).astype(jnp.float32)                 # crop 1 skips q1
                acc = acc + t0 * w0 + t1 * w1

        loss_ref[...] += acc

    return kernel


def dino_loss(student_output, teacher_output, center, epoch, *,
              ncrops, warmup_teacher_temp, teacher_temp,
              warmup_teacher_temp_epochs, nepochs,
              student_temp=0.1, center_momentum=0.9, crops_per_step=None):
    """Returns (scalar loss, updated center) — matches DINOLoss.forward plus the
    self.center side effect (returned explicitly since JAX is functional)."""
    schedule = np.concatenate((
        np.linspace(warmup_teacher_temp, teacher_temp, warmup_teacher_temp_epochs),
        np.ones(nepochs - warmup_teacher_temp_epochs) * teacher_temp))
    temp = float(schedule[int(epoch)])

    two_b, dim = teacher_output.shape
    batch = two_b // 2
    assert ncrops >= 2 and two_b == 2 * batch
    assert student_output.shape == (batch * ncrops, dim)
    assert center.shape == (1, dim)

    # Free reshapes (no jnp.pad HBM round-trip); trailing block dims equal the
    # full array dims so the (8,128) divisibility rule does not apply.
    student3 = student_output.reshape(ncrops, batch, dim)
    teacher3 = teacher_output.reshape(2, batch, dim)

    s_isz = student_output.dtype.itemsize
    t_isz = teacher_output.dtype.itemsize
    c_isz = center.dtype.itemsize

    def vmem_need(G):
        return (2 * G * batch * dim * s_isz        # student blocks (double-buffered)
                + 2 * 2 * batch * dim * t_isz      # teacher block (resident; x2 conservative)
                + 2 * dim * c_isz                  # center in
                + 2 * batch * dim * 4              # q scratch (f32)
                + 2 * dim * 4                      # new_center out
                + 2 * 8 * 128 * 4)                 # loss accumulator out

    cap = _vmem_cap_bytes()
    if crops_per_step is None:
        # Small-problem fast path: collapse the grid entirely when everything
        # comfortably fits in VMEM (per-step + launch overhead dominates there).
        crops_per_step = (ncrops if vmem_need(ncrops) <= min(16 << 20, cap // 4)
                          else 1)
    assert ncrops % crops_per_step == 0
    num_steps = ncrops // crops_per_step

    # TODO(synk): at very large out_dim (e.g. 65536 with batch 64) the resident
    # teacher + q scratch + student block can exceed VMEM (notably v7x 64 MiB);
    # that regime needs a lane-axis grid with a two-pass/online softmax.
    vmem_limit = int(min(max(vmem_need(crops_per_step) + (8 << 20), 32 << 20),
                         cap - cap // 8))

    kernel = make_dino_kernel(ncrops, batch, crops_per_step,
                              1.0 / temp, student_temp, center_momentum)

    loss_block, new_center = pl.pallas_call(
        kernel,
        out_shape=(jax.ShapeDtypeStruct((8, 128), jnp.float32),
                   jax.ShapeDtypeStruct((1, dim), jnp.float32)),
        grid=(num_steps,),
        in_specs=[pl.BlockSpec((crops_per_step, batch, dim), lambda i: (i, 0, 0)),
                  pl.BlockSpec((2, batch, dim), lambda i: (0, 0, 0)),
                  pl.BlockSpec((1, dim), lambda i: (0, 0))],
        out_specs=(pl.BlockSpec((8, 128), lambda i: (0, 0)),
                   pl.BlockSpec((1, dim), lambda i: (0, 0))),
        scratch_shapes=[pltpu.VMEM((2, batch, dim), jnp.float32)],
        compiler_params=pltpu.CompilerParams(
            # Sequential crop axis: q scratch is filled on step 0 and the loss
            # output is a resident accumulator; the kernel is HBM-bound so a
            # single TC is already at the bandwidth roofline.
            dimension_semantics=("arbitrary",),
            vmem_limit_bytes=vmem_limit),
    )(student3, teacher3, center)

    n_loss_terms = 2 * ncrops - 2
    loss = loss_block[0, 0] / jnp.float32(n_loss_terms)
    return loss, new_center


def _ref_dino_loss(student, teacher, center, temp, ncrops, student_temp,
                   center_momentum):
    batch = teacher.shape[0] // 2
    logp = jax.nn.log_softmax(student / student_temp, axis=-1)
    q = jax.nn.softmax((teacher - center) / temp, axis=-1)
    total, n = 0.0, 0
    for iq in range(2):
        qi = q[iq * batch:(iq + 1) * batch]
        for v in range(ncrops):
            if v == iq:
                continue
            lp = logp[v * batch:(v + 1) * batch]
            total = total + jnp.mean(jnp.sum(-qi * lp, axis=-1))
            n += 1
    loss = total / n
    bc = jnp.sum(teacher, axis=0, keepdims=True) / teacher.shape[0]
    new_center = center * center_momentum + bc * (1 - center_momentum)
    return loss, new_center


if __name__ == "__main__":
    warmup_teacher_temp = 0.04
    teacher_temp = 0.07
    warmup_teacher_temp_epochs = 5
    nepochs = 10
    epoch = 3
    student_temp = 0.1
    center_momentum = 0.9

    sched = np.concatenate((
        np.linspace(warmup_teacher_temp, teacher_temp, warmup_teacher_temp_epochs),
        np.ones(nepochs - warmup_teacher_temp_epochs) * teacher_temp))

    configs = [
        # small problem -> collapsed grid fast path, batch not a multiple of 8
        dict(out_dim=128, batch=2, ncrops=4, crops_per_step=None),
        # force the pipelined per-crop grid path (step-0 prep + accumulator)
        dict(out_dim=256, batch=8, ncrops=3, crops_per_step=1),
        # minimal ncrops, odd batch, per-crop grid path
        dict(out_dim=384, batch=5, ncrops=2, crops_per_step=1),
    ]

    key = jax.random.PRNGKey(0)
    for cfg in configs:
        out_dim, batch, ncrops = cfg["out_dim"], cfg["batch"], cfg["ncrops"]
        key, k1, k2, k3 = jax.random.split(key, 4)
        student_output = jax.random.normal(k1, (batch * ncrops, out_dim), jnp.float32)
        teacher_output = jax.random.normal(k2, (batch * 2, out_dim), jnp.float32)
        center = 0.01 * jax.random.normal(k3, (1, out_dim), jnp.float32)

        loss, new_center = dino_loss(
            student_output, teacher_output, center, epoch,
            ncrops=ncrops, warmup_teacher_temp=warmup_teacher_temp,
            teacher_temp=teacher_temp,
            warmup_teacher_temp_epochs=warmup_teacher_temp_epochs,
            nepochs=nepochs, student_temp=student_temp,
            center_momentum=center_momentum,
            crops_per_step=cfg["crops_per_step"])
        jax.block_until_ready((loss, new_center))

        ref_loss, ref_center = _ref_dino_loss(
            student_output, teacher_output, center, float(sched[epoch]),
            ncrops, student_temp, center_momentum)

        assert np.allclose(np.asarray(loss), np.asarray(ref_loss),
                           rtol=1e-4, atol=1e-5), (cfg, loss, ref_loss)
        assert np.allclose(np.asarray(new_center), np.asarray(ref_center),
                           rtol=1e-4, atol=1e-6), cfg

    print("KERNEL_OK")
</pallas_src>

<mosaic_0001>
module attributes {stable_mosaic.version = 11 : i64} {
  func.func @kernel(%arg0: i32, %arg1: memref<4x2x128xf32, #tpu.memory_space<vmem>>, %arg2: memref<2x2x128xf32, #tpu.memory_space<vmem>>, %arg3: memref<1x128xf32, #tpu.memory_space<vmem>>, %arg4: memref<8x128xf32, #tpu.memory_space<vmem>>, %arg5: memref<1x128xf32, #tpu.memory_space<vmem>>, %arg6: memref<2x2x128xf32, #tpu.memory_space<vmem>>) attributes {dimension_semantics = [#tpu.dimension_semantics<arbitrary>], iteration_bounds = array<i64: 1>, scalar_prefetch = 0 : i64, scratch_operands = 1 : i64, tpu.core_type = #tpu.core_type<tc>, window_params = [{transform_indices = @transform_0, window_bounds = array<i64: 4, 2, 128>}, {pipeline_mode = #tpu.pipeline_mode<synchronous>, transform_indices = @transform_1, window_bounds = array<i64: 2, 2, 128>}, {pipeline_mode = #tpu.pipeline_mode<synchronous>, transform_indices = @transform_2, window_bounds = array<i64: 1, 128>}, {pipeline_mode = #tpu.pipeline_mode<synchronous>, transform_indices = @transform_3, window_bounds = array<i64: 8, 128>}, {pipeline_mode = #tpu.pipeline_mode<synchronous>, transform_indices = @transform_4, window_bounds = array<i64: 1, 128>}]} {
    %c0 = arith.constant 0 : index
    %c0_0 = arith.constant 0 : index
    %0 = vector.load %arg3[%c0, %c0_0] : memref<1x128xf32, #tpu.memory_space<vmem>>, vector<1x128xf32>
    %cst = arith.constant 0.000000e+00 : f32
    %1 = vector.broadcast %cst : f32 to vector<1x128xf32>
    %c0_1 = arith.constant 0 : index
    %c0_2 = arith.constant 0 : index
    %c0_3 = arith.constant 0 : index
    %2 = vector.load %arg2[%c0_1, %c0_2, %c0_3] : memref<2x2x128xf32, #tpu.memory_space<vmem>>, vector<1x2x128xf32>
    %3 = vector.shape_cast %2 : vector<1x2x128xf32> to vector<2x128xf32>
    %cst_4 = arith.constant dense<0.000000e+00> : vector<128xf32>
    %4 = vector.multi_reduction <add>, %3, %cst_4 [0] : vector<2x128xf32> to vector<128xf32>
    %5 = vector.shape_cast %4 : vector<128xf32> to vector<1x128xf32>
    %6 = arith.addf %1, %5 : vector<1x128xf32>
    %7 = vector.broadcast %0 : vector<1x128xf32> to vector<2x128xf32>
    %8 = arith.subf %3, %7 : vector<2x128xf32>
    %cst_5 = arith.constant 1.600000e+01 : f32
    %9 = vector.broadcast %cst_5 : f32 to vector<2x128xf32>
    %10 = arith.mulf %8, %9 : vector<2x128xf32>
    %cst_6 = arith.constant dense<0xFF800000> : vector<2xf32>
    %11 = vector.multi_reduction <maximumf>, %10, %cst_6 [1] : vector<2x128xf32> to vector<2xf32>
    %12 = vector.shape_cast %11 : vector<2xf32> to vector<2x1xf32>
    %13 = vector.broadcast %12 : vector<2x1xf32> to vector<2x128xf32>
    %14 = arith.subf %10, %13 : vector<2x128xf32>
    %15 = math.exp %14 : vector<2x128xf32>
    %cst_7 = arith.constant dense<0.000000e+00> : vector<2xf32>
    %16 = vector.multi_reduction <add>, %15, %cst_7 [1] : vector<2x128xf32> to vector<2xf32>
    %17 = vector.shape_cast %16 : vector<2xf32> to vector<2x1xf32>
    %18 = tpu.reciprocal %17 : vector<2x1xf32> -> vector<2x1xf32>
    %19 = vector.broadcast %18 : vector<2x1xf32> to vector<2x128xf32>
    %20 = arith.mulf %15, %19 : vector<2x128xf32>
    %c0_8 = arith.constant 0 : index
    %c0_9 = arith.constant 0 : index
    %c0_10 = arith.constant 0 : index
    %21 = vector.load %arg6[%c0_8, %c0_9, %c0_10] : memref<2x2x128xf32, #tpu.memory_space<vmem>>, vector<1x2x128xf32>
    %22 = vector.shape_cast %21 : vector<1x2x128xf32> to vector<2x128xf32>
    %23 = vector.shape_cast %20 : vector<2x128xf32> to vector<1x2x128xf32>
    tpu.vector_store %arg6[%c0_8, %c0_9, %c0_10], %23 {strides = array<i32>} : memref<2x2x128xf32, #tpu.memory_space<vmem>>, vector<1x2x128xf32>,
    %c1 = arith.constant 1 : index
    %c0_11 = arith.constant 0 : index
    %c0_12 = arith.constant 0 : index
    %24 = vector.load %arg2[%c1, %c0_11, %c0_12] : memref<2x2x128xf32, #tpu.memory_space<vmem>>, vector<1x2x128xf32>
    %25 = vector.shape_cast %24 : vector<1x2x128xf32> to vector<2x128xf32>
    %cst_13 = arith.constant dense<0.000000e+00> : vector<128xf32>
    %26 = vector.multi_reduction <add>, %25, %cst_13 [0] : vector<2x128xf32> to vector<128xf32>
    %27 = vector.shape_cast %26 : vector<128xf32> to vector<1x128xf32>
    %28 = arith.addf %6, %27 : vector<1x128xf32>
    %29 = vector.broadcast %0 : vector<1x128xf32> to vector<2x128xf32>
    %30 = arith.subf %25, %29 : vector<2x128xf32>
    %cst_14 = arith.constant 1.600000e+01 : f32
    %31 = vector.broadcast %cst_14 : f32 to vector<2x128xf32>
    %32 = arith.mulf %30, %31 : vector<2x128xf32>
    %cst_15 = arith.constant dense<0xFF800000> : vector<2xf32>
    %33 = vector.multi_reduction <maximumf>, %32, %cst_15 [1] : vector<2x128xf32> to vector<2xf32>
    %34 = vector.shape_cast %33 : vector<2xf32> to vector<2x1xf32>
    %35 = vector.broadcast %34 : vector<2x1xf32> to vector<2x128xf32>
    %36 = arith.subf %32, %35 : vector<2x128xf32>
    %37 = math.exp %36 : vector<2x128xf32>
    %cst_16 = arith.constant dense<0.000000e+00> : vector<2xf32>
    %38 = vector.multi_reduction <add>, %37, %cst_16 [1] : vector<2x128xf32> to vector<2xf32>
    %39 = vector.shape_cast %38 : vector<2xf32> to vector<2x1xf32>
    %40 = tpu.reciprocal %39 : vector<2x1xf32> -> vector<2x1xf32>
    %41 = vector.broadcast %40 : vector<2x1xf32> to vector<2x128xf32>
    %42 = arith.mulf %37, %41 : vector<2x128xf32>
    %c1_17 = arith.constant 1 : index
    %c0_18 = arith.constant 0 : index
    %c0_19 = arith.constant 0 : index
    %43 = vector.load %arg6[%c1_17, %c0_18, %c0_19] : memref<2x2x128xf32, #tpu.memory_space<vmem>>, vector<1x2x128xf32>
    %44 = vector.shape_cast %43 : vector<1x2x128xf32> to vector<2x128xf32>
    %45 = vector.shape_cast %42 : vector<2x128xf32> to vector<1x2x128xf32>
    tpu.vector_store %arg6[%c1_17, %c0_18, %c0_19], %45 {strides = array<i32>} : memref<2x2x128xf32, #tpu.memory_space<vmem>>, vector<1x2x128xf32>,
    %cst_20 = arith.constant 0.899999976 : f32
    %46 = vector.broadcast %cst_20 : f32 to vector<1x128xf32>
    %47 = arith.mulf %0, %46 : vector<1x128xf32>
    %cst_21 = arith.constant 2.500000e-02 : f32
    %48 = vector.broadcast %cst_21 : f32 to vector<1x128xf32>
    %49 = arith.mulf %28, %48 : vector<1x128xf32>
    %50 = arith.addf %47, %49 : vector<1x128xf32>
    %c0_22 = arith.constant 0 : index
    %c0_23 = arith.constant 0 : index
    %51 = vector.load %arg5[%c0_22, %c0_23] : memref<1x128xf32, #tpu.memory_space<vmem>>, vector<1x128xf32>
    tpu.vector_store %arg5[%c0_22, %c0_23], %50 {strides = array<i32>} : memref<1x128xf32, #tpu.memory_space<vmem>>, vector<1x128xf32>,
    %cst_24 = arith.constant 0.000000e+00 : f32
    %52 = vector.broadcast %cst_24 : f32 to vector<8x128xf32>
    %c0_25 = arith.constant 0 : index
    %c0_26 = arith.constant 0 : index
    %53 = vector.load %arg4[%c0_25, %c0_26] : memref<8x128xf32, #tpu.memory_space<vmem>>, vector<8x128xf32>
    tpu.vector_store %arg4[%c0_25, %c0_26], %52 {strides = array<i32>} : memref<8x128xf32, #tpu.memory_space<vmem>>, vector<8x128xf32>,
    %c0_27 = arith.constant 0 : index
    %c0_28 = arith.constant 0 : index
    %c0_29 = arith.constant 0 : index
    %54 = vector.load %arg6[%c0_27, %c0_28, %c0_29] : memref<2x2x128xf32, #tpu.memory_space<vmem>>, vector<1x2x128xf32>
    %55 = vector.shape_cast %54 : vector<1x2x128xf32> to vector<2x128xf32>
    %c1_30 = arith.constant 1 : index
    %c0_31 = arith.constant 0 : index
    %c0_32 = arith.constant 0 : index
    %56 = vector.load %arg6[%c1_30, %c0_31, %c0_32] : memref<2x2x128xf32, #tpu.memory_space<vmem>>, vector<1x2x128xf32>
    %57 = vector.shape_cast %56 : vector<1x2x128xf32> to vector<2x128xf32>
    %c0_33 = arith.constant 0 : index
    %c0_34 = arith.constant 0 : index
    %c0_35 = arith.constant 0 : index
    %58 = vector.load %arg1[%c0_33, %c0_34, %c0_35] : memref<4x2x128xf32, #tpu.memory_space<vmem>>, vector<1x2x128xf32>
    %59 = vector.shape_cast %58 : vector<1x2x128xf32> to vector<2x128xf32>
    %cst_36 = arith.constant 1.000000e+01 : f32
    %60 = vector.broadcast %cst_36 : f32 to vector<2x128xf32>
    %61 = arith.mulf %59, %60 : vector<2x128xf32>
    %cst_37 = arith.constant dense<0xFF800000> : vector<2xf32>
    %62 = vector.multi_reduction <maximumf>, %61, %cst_37 [1] : vector<2x128xf32> to vector<2xf32>
    %63 = vector.shape_cast %62 : vector<2xf32> to vector<2x1xf32>
    %64 = vector.broadcast %63 : vector<2x1xf32> to vector<2x128xf32>
    %65 = arith.subf %61, %64 : vector<2x128xf32>
    %66 = math.exp %65 : vector<2x128xf32>
    %cst_38 = arith.constant dense<0.000000e+00> : vector<2xf32>
    %67 = vector.multi_reduction <add>, %66, %cst_38 [1] : vector<2x128xf32> to vector<2xf32>
    %68 = vector.shape_cast %67 : vector<2xf32> to vector<2x1xf32>
    %69 = math.log %68 : vector<2x1xf32>
    %70 = arith.mulf %57, %65 : vector<2x128xf32>
    %cst_39 = arith.constant dense<0.000000e+00> : vector<2xf32>
    %71 = vector.multi_reduction <add>, %70, %cst_39 [1] : vector<2x128xf32> to vector<2xf32>
    %72 = vector.shape_cast %71 : vector<2xf32> to vector<2x1xf32>
    %cst_40 = arith.constant dense<0.000000e+00> : vector<2xf32>
    %73 = vector.multi_reduction <add>, %57, %cst_40 [1] : vector<2x128xf32> to vector<2xf32>
    %74 = vector.shape_cast %73 : vector<2xf32> to vector<2x1xf32>
    %75 = arith.mulf %74, %69 : vector<2x1xf32>
    %76 = arith.subf %72, %75 : vector<2x1xf32>
    %77 = vector.shape_cast %76 : vector<2x1xf32> to vector<1x2x1xf32>
    %cst_41 = arith.constant dense<0.000000e+00> : vector<1xf32>
    %78 = vector.multi_reduction <add>, %77, %cst_41 [1, 2] : vector<1x2x1xf32> to vector<1xf32>
    %79 = vector.shape_cast %78 : vector<1xf32> to vector<1x1x1xf32>
    %80 = vector.extract %79[0, 0, 0] : f32 from vector<1x1x1xf32>
    %cst_42 = arith.constant 0.000000e+00 : f32
    %81 = arith.subf %cst_42, %80 : f32
    %cst_43 = arith.constant 5.000000e-01 : f32
    %82 = arith.mulf %81, %cst_43 : f32
    %cst_44 = arith.constant 0.000000e+00 : f32
    %83 = arith.addf %cst_44, %82 : f32
    %c1_45 = arith.constant 1 : index
    %c0_46 = arith.constant 0 : index
    %c0_47 = arith.constant 0 : index
    %84 = vector.load %arg1[%c1_45, %c0_46, %c0_47] : memref<4x2x128xf32, #tpu.memory_space<vmem>>, vector<1x2x128xf32>
    %85 = vector.shape_cast %84 : vector<1x2x128xf32> to vector<2x128xf32>
    %cst_48 = arith.constant 1.000000e+01 : f32
    %86 = vector.broadcast %cst_48 : f32 to vector<2x128xf32>
    %87 = arith.mulf %85, %86 : vector<2x128xf32>
    %cst_49 = arith.constant dense<0xFF800000> : vector<2xf32>
    %88 = vector.multi_reduction <maximumf>, %87, %cst_49 [1] : vector<2x128xf32> to vector<2xf32>
    %89 = vector.shape_cast %88 : vector<2xf32> to vector<2x1xf32>
    %90 = vector.broadcast %89 : vector<2x1xf32> to vector<2x128xf32>
    %91 = arith.subf %87, %90 : vector<2x128xf32>
    %92 = math.exp %91 : vector<2x128xf32>
    %cst_50 = arith.constant dense<0.000000e+00> : vector<2xf32>
    %93 = vector.multi_reduction <add>, %92, %cst_50 [1] : vector<2x128xf32> to vector<2xf32>
    %94 = vector.shape_cast %93 : vector<2xf32> to vector<2x1xf32>
    %95 = math.log %94 : vector<2x1xf32>
    %96 = arith.mulf %55, %91 : vector<2x128xf32>
    %cst_51 = arith.constant dense<0.000000e+00> : vector<2xf32>
    %97 = vector.multi_reduction <add>, %96, %cst_51 [1] : vector<2x128xf32> to vector<2xf32>
    %98 = vector.shape_cast %97 : vector<2xf32> to vector<2x1xf32>
    %cst_52 = arith.constant dense<0.000000e+00> : vector<2xf32>
    %99 = vector.multi_reduction <add>, %55, %cst_52 [1] : vector<2x128xf32> to vector<2xf32>
    %100 = vector.shape_cast %99 : vector<2xf32> to vector<2x1xf32>
    %101 = arith.mulf %100, %95 : vector<2x1xf32>
    %102 = arith.subf %98, %101 : vector<2x1xf32>
    %103 = vector.shape_cast %102 : vector<2x1xf32> to vector<1x2x1xf32>
    %cst_53 = arith.constant dense<0.000000e+00> : vector<1xf32>
    %104 = vector.multi_reduction <add>, %103, %cst_53 [1, 2] : vector<1x2x1xf32> to vector<1xf32>
    %105 = vector.shape_cast %104 : vector<1xf32> to vector<1x1x1xf32>
    %106 = vector.extract %105[0, 0, 0] : f32 from vector<1x1x1xf32>
    %cst_54 = arith.constant 0.000000e+00 : f32
    %107 = arith.subf %cst_54, %106 : f32
    %cst_55 = arith.constant 5.000000e-01 : f32
    %108 = arith.mulf %107, %cst_55 : f32
    %109 = arith.addf %83, %108 : f32
    %c2 = arith.constant 2 : index
    %c0_56 = arith.constant 0 : index
    %c0_57 = arith.constant 0 : index
    %110 = vector.load %arg1[%c2, %c0_56, %c0_57] : memref<4x2x128xf32, #tpu.memory_space<vmem>>, vector<1x2x128xf32>
    %111 = vector.shape_cast %110 : vector<1x2x128xf32> to vector<2x128xf32>
    %cst_58 = arith.constant 1.000000e+01 : f32
    %112 = vector.broadcast %cst_58 : f32 to vector<2x128xf32>
    %113 = arith.mulf %111, %112 : vector<2x128xf32>
    %cst_59 = arith.constant dense<0xFF800000> : vector<2xf32>
    %114 = vector.multi_reduction <maximumf>, %113, %cst_59 [1] : vector<2x128xf32> to vector<2xf32>
    %115 = vector.shape_cast %114 : vector<2xf32> to vector<2x1xf32>
    %116 = vector.broadcast %115 : vector<2x1xf32> to vector<2x128xf32>
    %117 = arith.subf %113, %116 : vector<2x128xf32>
    %118 = math.exp %117 : vector<2x128xf32>
    %cst_60 = arith.constant dense<0.000000e+00> : vector<2xf32>
    %119 = vector.multi_reduction <add>, %118, %cst_60 [1] : vector<2x128xf32> to vector<2xf32>
    %120 = vector.shape_cast %119 : vector<2xf32> to vector<2x1xf32>
    %121 = math.log %120 : vector<2x1xf32>
    %122 = arith.mulf %55, %117 : vector<2x128xf32>
    %cst_61 = arith.constant dense<0.000000e+00> : vector<2xf32>
    %123 = vector.multi_reduction <add>, %122, %cst_61 [1] : vector<2x128xf32> to vector<2xf32>
    %124 = vector.shape_cast %123 : vector<2xf32> to vector<2x1xf32>
    %cst_62 = arith.constant dense<0.000000e+00> : vector<2xf32>
    %125 = vector.multi_reduction <add>, %55, %cst_62 [1] : vector<2x128xf32> to vector<2xf32>
    %126 = vector.shape_cast %125 : vector<2xf32> to vector<2x1xf32>
    %127 = arith.mulf %126, %121 : vector<2x1xf32>
    %128 = arith.subf %124, %127 : vector<2x1xf32>
    %129 = vector.shape_cast %128 : vector<2x1xf32> to vector<1x2x1xf32>
    %cst_63 = arith.constant dense<0.000000e+00> : vector<1xf32>
    %130 = vector.multi_reduction <add>, %129, %cst_63 [1, 2] : vector<1x2x1xf32> to vector<1xf32>
    %131 = vector.shape_cast %130 : vector<1xf32> to vector<1x1x1xf32>
    %132 = vector.extract %131[0, 0, 0] : f32 from vector<1x1x1xf32>
    %cst_64 = arith.constant 0.000000e+00 : f32
    %133 = arith.subf %cst_64, %132 : f32
    %cst_65 = arith.constant 5.000000e-01 : f32
    %134 = arith.mulf %133, %cst_65 : f32
    %135 = arith.addf %109, %134 : f32
    %136 = arith.mulf %57, %117 : vector<2x128xf32>
    %cst_66 = arith.constant dense<0.000000e+00> : vector<2xf32>
    %137 = vector.multi_reduction <add>, %136, %cst_66 [1] : vector<2x128xf32> to vector<2xf32>
    %138 = vector.shape_cast %137 : vector<2xf32> to vector<2x1xf32>
    %cst_67 = arith.constant dense<0.000000e+00> : vector<2xf32>
    %139 = vector.multi_reduction <add>, %57, %cst_67 [1] : vector<2x128xf32> to vector<2xf32>
    %140 = vector.shape_cast %139 : vector<2xf32> to vector<2x1xf32>
    %141 = arith.mulf %140, %121 : vector<2x1xf32>
    %142 = arith.subf %138, %141 : vector<2x1xf32>
    %143 = vector.shape_cast %142 : vector<2x1xf32> to vector<1x2x1xf32>
    %cst_68 = arith.constant dense<0.000000e+00> : vector<1xf32>
    %144 = vector.multi_reduction <add>, %143, %cst_68 [1, 2] : vector<1x2x1xf32> to vector<1xf32>
    %145 = vector.shape_cast %144 : vector<1xf32> to vector<1x1x1xf32>
    %146 = vector.extract %145[0, 0, 0] : f32 from vector<1x1x1xf32>
    %cst_69 = arith.constant 0.000000e+00 : f32
    %147 = arith.subf %cst_69, %146 : f32
    %cst_70 = arith.constant 5.000000e-01 : f32
    %148 = arith.mulf %147, %cst_70 : f32
    %149 = arith.addf %135, %148 : f32
    %c3 = arith.constant 3 : index
    %c0_71 = arith.constant 0 : index
    %c0_72 = arith.constant 0 : index
    %150 = vector.load %arg1[%c3, %c0_71, %c0_72] : memref<4x2x128xf32, #tpu.memory_space<vmem>>, vector<1x2x128xf32>
    %151 = vector.shape_cast %150 : vector<1x2x128xf32> to vector<2x128xf32>
    %cst_73 = arith.constant 1.000000e+01 : f32
    %152 = vector.broadcast %cst_73 : f32 to vector<2x128xf32>
    %153 = arith.mulf %151, %152 : vector<2x128xf32>
    %cst_74 = arith.constant dense<0xFF800000> : vector<2xf32>
    %154 = vector.multi_reduction <maximumf>, %153, %cst_74 [1] : vector<2x128xf32> to vector<2xf32>
    %155 = vector.shape_cast %154 : vector<2xf32> to vector<2x1xf32>
    %156 = vector.broadcast %155 : vector<2x1xf32> to vector<2x128xf32>
    %157 = arith.subf %153, %156 : vector<2x128xf32>
    %158 = math.exp %157 : vector<2x128xf32>
    %cst_75 = arith.constant dense<0.000000e+00> : vector<2xf32>
    %159 = vector.multi_reduction <add>, %158, %cst_75 [1] : vector<2x128xf32> to vector<2xf32>
    %160 = vector.shape_cast %159 : vector<2xf32> to vector<2x1xf32>
    %161 = math.log %160 : vector<2x1xf32>
    %162 = arith.mulf %55, %157 : vector<2x128xf32>
    %cst_76 = arith.constant dense<0.000000e+00> : vector<2xf32>
    %163 = vector.multi_reduction <add>, %162, %cst_76 [1] : vector<2x128xf32> to vector<2xf32>
    %164 = vector.shape_cast %163 : vector<2xf32> to vector<2x1xf32>
    %cst_77 = arith.constant dense<0.000000e+00> : vector<2xf32>
    %165 = vector.multi_reduction <add>, %55, %cst_77 [1] : vector<2x128xf32> to vector<2xf32>
    %166 = vector.shape_cast %165 : vector<2xf32> to vector<2x1xf32>
    %167 = arith.mulf %166, %161 : vector<2x1xf32>
    %168 = arith.subf %164, %167 : vector<2x1xf32>
    %169 = vector.shape_cast %168 : vector<2x1xf32> to vector<1x2x1xf32>
    %cst_78 = arith.constant dense<0.000000e+00> : vector<1xf32>
    %170 = vector.multi_reduction <add>, %169, %cst_78 [1, 2] : vector<1x2x1xf32> to vector<1xf32>
    %171 = vector.shape_cast %170 : vector<1xf32> to vector<1x1x1xf32>
    %172 = vector.extract %171[0, 0, 0] : f32 from vector<1x1x1xf32>
    %cst_79 = arith.constant 0.000000e+00 : f32
    %173 = arith.subf %cst_79, %172 : f32
    %cst_80 = arith.constant 5.000000e-01 : f32
    %174 = arith.mulf %173, %cst_80 : f32
    %175 = arith.addf %149, %174 : f32
    %176 = arith.mulf %57, %157 : vector<2x128xf32>
    %cst_81 = arith.constant dense<0.000000e+00> : vector<2xf32>
    %177 = vector.multi_reduction <add>, %176, %cst_81 [1] : vector<2x128xf32> to vector<2xf32>
    %178 = vector.shape_cast %177 : vector<2xf32> to vector<2x1xf32>
    %cst_82 = arith.constant dense<0.000000e+00> : vector<2xf32>
    %179 = vector.multi_reduction <add>, %57, %cst_82 [1] : vector<2x128xf32> to vector<2xf32>
    %180 = vector.shape_cast %179 : vector<2xf32> to vector<2x1xf32>
    %181 = arith.mulf %180, %161 : vector<2x1xf32>
    %182 = arith.subf %178, %181 : vector<2x1xf32>
    %183 = vector.shape_cast %182 : vector<2x1xf32> to vector<1x2x1xf32>
    %cst_83 = arith.constant dense<0.000000e+00> : vector<1xf32>
    %184 = vector.multi_reduction <add>, %183, %cst_83 [1, 2] : vector<1x2x1xf32> to vector<1xf32>
    %185 = vector.shape_cast %184 : vector<1xf32> to vector<1x1x1xf32>
    %186 = vector.extract %185[0, 0, 0] : f32 from vector<1x1x1xf32>
    %cst_84 = arith.constant 0.000000e+00 : f32
    %187 = arith.subf %cst_84, %186 : f32
    %cst_85 = arith.constant 5.000000e-01 : f32
    %188 = arith.mulf %187, %cst_85 : f32
    %189 = arith.addf %175, %188 : f32
    %c0_86 = arith.constant 0 : index
    %c0_87 = arith.constant 0 : index
    %190 = vector.load %arg4[%c0_86, %c0_87] : memref<8x128xf32, #tpu.memory_space<vmem>>, vector<8x128xf32>
    %191 = vector.broadcast %189 : f32 to vector<8x128xf32>
    %192 = arith.addf %190, %191 : vector<8x128xf32>
    %c0_88 = arith.constant 0 : index
    %c0_89 = arith.constant 0 : index
    %193 = vector.load %arg4[%c0_88, %c0_89] : memref<8x128xf32, #tpu.memory_space<vmem>>, vector<8x128xf32>
    tpu.vector_store %arg4[%c0_88, %c0_89], %192 {strides = array<i32>} : memref<8x128xf32, #tpu.memory_space<vmem>>, vector<8x128xf32>,
    return
  }
  func.func @transform_0(%arg0: i32) -> (i32, i32, i32) {
    %c0_i32 = arith.constant 0 : i32
    %c0_i32_0 = arith.constant 0 : i32
    %c0_i32_1 = arith.constant 0 : i32
    return %arg0, %c0_i32, %c0_i32_0 : i32, i32, i32
  }
  func.func @transform_1(%arg0: i32) -> (i32, i32, i32) {
    %c0_i32 = arith.constant 0 : i32
    %c0_i32_0 = arith.constant 0 : i32
    %c0_i32_1 = arith.constant 0 : i32
    %c0_i32_2 = arith.constant 0 : i32
    return %c0_i32, %c0_i32_0, %c0_i32_1 : i32, i32, i32
  }
  func.func @transform_2(%arg0: i32) -> (i32, i32) {
    %c0_i32 = arith.constant 0 : i32
    %c0_i32_0 = arith.constant 0 : i32
    %c0_i32_1 = arith.constant 0 : i32
    return %c0_i32, %c0_i32_0 : i32, i32
  }
  func.func @transform_3(%arg0: i32) -> (i32, i32) {
    %c0_i32 = arith.constant 0 : i32
    %c0_i32_0 = arith.constant 0 : i32
    %c0_i32_1 = arith.constant 0 : i32
    return %c0_i32, %c0_i32_0 : i32, i32
  }
  func.func @transform_4(%arg0: i32) -> (i32, i32) {
    %c0_i32 = arith.constant 0 : i32
    %c0_i32_0 = arith.constant 0 : i32
    %c0_i32_1 = arith.constant 0 : i32
    return %c0_i32, %c0_i32_0 : i32, i32
  }
}

</mosaic_0001>

<llo_original>
// kernel: tpu_custom_call.1
$region0: #{tpu_custom_call.1}
  #allocation0 [shape = 'u32[]', space=smem, size = 0x4, offset = 0x4, fixed_abs, tag = 'smem constant byte address 0x4 - core index']
  #allocation1 [shape = 'u32[72,128]{1,0:T(1,128)}', space=vmem, size = 0x9000, scoped, tag = 'internal scratch']
  #allocation2 [shape = 'f32[2,2,128]{2,1,0:T(2,128)}', space=vmem, size = 0x800, scoped, tag = 'scratch operand']
  %s0 = inlined_call_operand.hbm [shape: f32[4,2,128], index: 0, kind: input, shape index: {}]
  %s1 = inlined_call_operand.hbm [shape: f32[2,2,128], index: 1, kind: input, shape index: {}]
  %s2 = inlined_call_operand.vmem [shape: f32[1,128], index: 2, kind: input, shape index: {}]
  %s3 = inlined_call_operand.hbm [shape: f32[8,128], index: 3, kind: output, shape index: {0}]
  %s4 = inlined_call_operand.hbm [shape: f32[1,128], index: 4, kind: output, shape index: {1}]
  %5 = xla_tuple %s3, %s4
  %s6 = sld [smem:[#allocation0]]
  $region38: #{tpu_custom_call.1} parent=0
    _
  %s8 = ssub.s32 1, %s6
  %s9 = scalar_select 0, %s8, %s6
  $region1: #{tpu_custom_call.1} parent=0
    #allocation3 [shape = 'u8[4096]{0}', space=vmem, size = 0x1000, scoped, tag = 'input window, operand 0, single buffered']
    #allocation4 [shape = 's32[1]{0}', space=sflag, size = 0x4, scoped, tag = 'scoped memory for tpu_custom_call.1']
    #allocation5 [shape = 's32[1]{0}', space=sflag, size = 0x4, scoped, tag = 'scoped memory for tpu_custom_call.1']
    #allocation6 [shape = 'u8[2048]{0}', space=vmem, size = 0x800, scoped, tag = 'input window, operand 1, single buffered']
    #allocation7 [shape = 's32[1]{0}', space=sflag, size = 0x4, scoped, tag = 'scoped memory for tpu_custom_call.1']
    #allocation8 [shape = 'u8[4096]{0}', space=vmem, size = 0x1000, scoped, tag = 'output window, operand 0, single buffered']
    #allocation9 [shape = 'u8[512]{0}', space=vmem, size = 0x400, scoped, tag = 'output window, operand 1, single buffered']
    #allocation10 [shape = 's32[1]{0}', space=sflag, size = 0x4, scoped, tag = 'scoped memory for tpu_custom_call.1']
    %10 = vsyncpa [#allocation4], 0
    %11 = vsyncpa [#allocation7], 0
    %12 = vsyncpa [#allocation5], 0
    %13 = vsyncpa [#allocation10], 0
    // Predicated region
    $region2: #{tpu_custom_call.1} parent=1 // pred_check
      _
    $region3: #{tpu_custom_call.1} parent=1 // pred_check_branch
      %15 = sbr.rel (0) target = $region5
    $region4: #{tpu_custom_call.1} parent=1 // pred_region
      %17 = vsyncadd [#allocation4], 0
      %s18 = sshll.u32 %s0, 4
      %s19 = int_to_ptr.hbm [resolvable:$true] %s18
      %s20 = sshll.u32 [#allocation3], 4
      %s21 = int_to_ptr.vmem [resolvable:$true] %s20
      %26 = dma.hbm_to_vmem [thread:$0]  %s19, 128, %s21, [#allocation4], 32, 32, 2
    $region5: #{tpu_custom_call.1} parent=1 // pred_fallthru
      _
    // Predicated region
    $region6: #{tpu_custom_call.1} parent=1 // pred_check
      _
    $region7: #{tpu_custom_call.1} parent=1 // pred_check_branch
      %28 = sbr.rel (0) target = $region9
    $region8: #{tpu_custom_call.1} parent=1 // pred_region
      %30 = vsyncadd [#allocation7], 0
      %s31 = sshll.u32 %s1, 4
      %s32 = int_to_ptr.hbm [resolvable:$true] %s31
      %s33 = sshll.u32 [#allocation6], 4
      %s34 = int_to_ptr.vmem [resolvable:$true] %s33
      %39 = dma.hbm_to_vmem [thread:$0]  %s32, 64, %s34, [#allocation7], 32, 32, 2
    $region9: #{tpu_custom_call.1} parent=1 // pred_fallthru
      _
    // Predicated region
    $region10: #{tpu_custom_call.1} parent=1 // pred_check
      _
    $region11: #{tpu_custom_call.1} parent=1 // pred_check_branch
      %41 = sbr.rel (0) target = $region13
    $region12: #{tpu_custom_call.1} parent=1 // pred_region
      _
    $region13: #{tpu_custom_call.1} parent=1 // pred_fallthru
      _
    // Predicated region
    $region14: #{tpu_custom_call.1} parent=1 // pred_check
      _
    $region15: #{tpu_custom_call.1} parent=1 // pred_check_branch
      %43 = sbr.rel (0) target = $region17
    $region16: #{tpu_custom_call.1} parent=1 // pred_region
      %45 = dma.done [#allocation4], 128
    $region17: #{tpu_custom_call.1} parent=1 // pred_fallthru
      _
    // Predicated region
    $region18: #{tpu_custom_call.1} parent=1 // pred_check
      _
    $region19: #{tpu_custom_call.1} parent=1 // pred_check_branch
      %47 = sbr.rel (0) target = $region21
    $region20: #{tpu_custom_call.1} parent=1 // pred_region
      %49 = dma.done [#allocation7], 64
    $region21: #{tpu_custom_call.1} parent=1 // pred_fallthru
      _
    %v50 = vld [vmem:[%s2] sm:$0x1]
    %v51 = vld [vmem:[#allocation6] sm:$0x3]
    %vm52 = vcmask 1041408
    %v53 = vsel %vm52, %v51, 0.0
    %v54 = vrot.slane %v53, 4
    %v55 = vadd.f32 %v53, %v54
    %v56 = vrot.slane %v55, 2
    %v57 = vadd.f32 %v55, %v56
    %v58 = vrot.slane %v57, 1
    %v59 = vadd.f32 %v57, %v58
    %v60 = vadd.f32 %v59, 0.0
    %v62 = vperm.slane %v50, 0
    %v64 = vsub.f32 %v51, %v62
    %v65 = vmul.f32 %v64, 16.0
    %v66 = vsel %vm52, %v65, -inf
    %67 = vmax.xlane.f32.xlu0 %v66
    %v68 = vpop.xlane.xlu0 %67
    %v69 = vsub.f32 %v65, %v68
    %v70 = vmul.f32 %v69, 1.442695
    %v71 = vpow.pop %v70
    %v72 = vsel %vm52, %v71, 0.0
    %73 = vadd.xlane.f32.xlu0 %v72
    %v74 = vpop.xlane.xlu0 %73
    %v75 = vrcp.pop %v74
    %v76 = vmul.f32 %v74, %v75
    %v77 = vsub.f32 1.0, %v76
    %v78 = vmul.f32 %v75, %v77
    %v79 = vadd.f32 %v75, %v78
    %vm80 = vweird.f32 %v74
    %vm81 = vweird.f32 %v75
    %vm82 = vmor %vm80, %vm81
    %v83 = vsel %vm82, %v75, %v79
    %v84 = vand.u32 2147483647, %v74
    %vm85 = vcmp.eq.f32.partialorder %v84, 8.507059e+37
    %v86 = vand.u32 %v74, 2147483648
    %v87 = vor.u32 1.1754944e-38, %v86
    %v88 = vsel %vm85, %v87, %v83
    %v89 = vmul.f32 %v71, %v88
    %90 = vst [vmem:[#allocation2] sm:$0x3] %v89
    %s91 = scalar_lea.vmem [#allocation6], 2
    %v92 = vld [vmem:[%s91] sm:$0x3]
    %v93 = vsel %vm52, %v92, 0.0
    %v94 = vrot.slane %v93, 4
    %v95 = vadd.f32 %v93, %v94
    %v96 = vrot.slane %v95, 2
    %v97 = vadd.f32 %v95, %v96
    %v98 = vrot.slane %v97, 1
    %v99 = vadd.f32 %v97, %v98
    %v100 = vadd.f32 %v60, %v99
    %v101 = vsub.f32 %v92, %v62
    %v102 = vmul.f32 %v101, 16.0
    %v103 = vsel %vm52, %v102, -inf
    %104 = vmax.xlane.f32.xlu0 %v103
    %v105 = vpop.xlane.xlu0 %104
    %v106 = vsub.f32 %v102, %v105
    %v107 = vmul.f32 %v106, 1.442695
    %v108 = vpow.pop %v107
    %v109 = vsel %vm52, %v108, 0.0
    %110 = vadd.xlane.f32.xlu0 %v109
    %v111 = vpop.xlane.xlu0 %110
    %v112 = vrcp.pop %v111
    %v113 = vmul.f32 %v111, %v112
    %v114 = vsub.f32 1.0, %v113
    %v115 = vmul.f32 %v112, %v114
    %v116 = vadd.f32 %v112, %v115
    %vm117 = vweird.f32 %v111
    %vm118 = vweird.f32 %v112
    %vm119 = vmor %vm117, %vm118
    %v120 = vsel %vm119, %v112, %v116
    %v121 = vand.u32 2147483647, %v111
    %vm122 = vcmp.eq.f32.partialorder %v121, 8.507059e+37
    %v123 = vand.u32 %v111, 2147483648
    %v124 = vor.u32 1.1754944e-38, %v123
    %v125 = vsel %vm122, %v124, %v120
    %v126 = vmul.f32 %v108, %v125
    %s127 = scalar_lea.vmem [#allocation2], 2
    %128 = vst [vmem:[%s127] sm:$0x3] %v126
    %v129 = vmul.f32 %v50, 0.9
    %v130 = vmul.f32 %v100, 0.025
    %v131 = vadd.f32 %v129, %v130
    %132 = vst [vmem:[#allocation9] sm:$0x1] %v131
    %133 = vst [vmem:[#allocation8] sm:$0xff] 0.0
    %v134 = vld [vmem:[#allocation2] sm:$0x3]
    %v135 = vld [vmem:[%s127] sm:$0x3]
    %v136 = vld [vmem:[#allocation3] sm:$0x3]
    %v137 = vmul.f32 %v136, 10.0
    %v138 = vsel %vm52, %v137, -inf
    %139 = vmax.xlane.f32.xlu0 %v138
    %v140 = vpop.xlane.xlu0 %139
    %v141 = vsub.f32 %v137, %v140
    %v142 = vmul.f32 %v141, 1.442695
    %v143 = vpow.pop %v142
    %v144 = vsel %vm52, %v143, 0.0
    %145 = vadd.xlane.f32.xlu0 %v144
    %v146 = vpop.xlane.xlu0 %145
    %v147 = vlog2.pop %v146
    %v148 = vmul.f32 %v147, 0.6931472
    %v149 = vmul.f32 %v135, %v141
    %v150 = vsel %vm52, %v149, 0.0
    %151 = vadd.xlane.f32.xlu0 %v150
    %v152 = vpop.xlane.xlu0 %151
    %v153 = vsel %vm52, %v135, 0.0
    %154 = vadd.xlane.f32.xlu0 %v153
    %v155 = vpop.xlane.xlu0 %154
    %v156 = vmul.f32 %v155, %v148
    %v157 = vsub.f32 %v152, %v156
    %vm158 = vcmask 1024
    %v159 = vsel %vm158, %v157, 0.0
    %160 = vadd.xlane.f32.xlu0 %v159
    %v161 = vpop.xlane.xlu0 %160
    %v162 = vrot.slane %v161, 4
    %v163 = vadd.f32 %v161, %v162
    %v164 = vrot.slane %v163, 2
    %v165 = vadd.f32 %v163, %v164
    %v166 = vrot.slane %v165, 1
    %v167 = vadd.f32 %v165, %v166
    %s168 = vtos %v167
    %s169 = ssub.f32 0.0, %s168
    %s170 = smul.f32 %s169, 0.5
    %s171 = sadd.f32 %s170, 0.0
    %s172 = scalar_lea.vmem [#allocation3], 2
    %v173 = vld [vmem:[%s172] sm:$0x3]
    %v174 = vmul.f32 %v173, 10.0
    %v175 = vsel %vm52, %v174, -inf
    %176 = vmax.xlane.f32.xlu0 %v175
    %v177 = vpop.xlane.xlu0 %176
    %v178 = vsub.f32 %v174, %v177
    %v179 = vmul.f32 %v178, 1.442695
    %v180 = vpow.pop %v179
    %v181 = vsel %vm52, %v180, 0.0
    %182 = vadd.xlane.f32.xlu0 %v181
    %v183 = vpop.xlane.xlu0 %182
    %v184 = vlog2.pop %v183
    %v185 = vmul.f32 %v184, 0.6931472
    %v186 = vmul.f32 %v134, %v178
    %v187 = vsel %vm52, %v186, 0.0
    %188 = vadd.xlane.f32.xlu0 %v187
    %v189 = vpop.xlane.xlu0 %188
    %v190 = vsel %vm52, %v134, 0.0
    %191 = vadd.xlane.f32.xlu0 %v190
    %v192 = vpop.xlane.xlu0 %191
    %v193 = vmul.f32 %v192, %v185
    %v194 = vsub.f32 %v189, %v193
    %v195 = vsel %vm158, %v194, 0.0
    %196 = vadd.xlane.f32.xlu0 %v195
    %v197 = vpop.xlane.xlu0 %196
    %v198 = vrot.slane %v197, 4
    %v199 = vadd.f32 %v197, %v198
    %v200 = vrot.slane %v199, 2
    %v201 = vadd.f32 %v199, %v200
    %v202 = vrot.slane %v201, 1
    %v203 = vadd.f32 %v201, %v202
    %s204 = vtos %v203
    %s205 = ssub.f32 0.0, %s204
    %s206 = smul.f32 %s205, 0.5
    %s207 = sadd.f32 %s171, %s206
    %s208 = scalar_lea.vmem [#allocation3], 4
    %v209 = vld [vmem:[%s208] sm:$0x3]
    %v210 = vmul.f32 %v209, 10.0
    %v211 = vsel %vm52, %v210, -inf
    %212 = vmax.xlane.f32.xlu0 %v211
    %v213 = vpop.xlane.xlu0 %212
    %v214 = vsub.f32 %v210, %v213
    %v215 = vmul.f32 %v214, 1.442695
    %v216 = vpow.pop %v215
    %v217 = vsel %vm52, %v216, 0.0
    %218 = vadd.xlane.f32.xlu0 %v217
    %v219 = vpop.xlane.xlu0 %218
    %v220 = vlog2.pop %v219
    %v221 = vmul.f32 %v220, 0.6931472
    %v222 = vmul.f32 %v134, %v214
    %v223 = vsel %vm52, %v222, 0.0
    %224 = vadd.xlane.f32.xlu0 %v223
    %v225 = vpop.xlane.xlu0 %224
    %v226 = vmul.f32 %v192, %v221
    %v227 = vsub.f32 %v225, %v226
    %v228 = vsel %vm158, %v227, 0.0
    %229 = vadd.xlane.f32.xlu0 %v228
    %v230 = vpop.xlane.xlu0 %229
    %v231 = vrot.slane %v230, 4
    %v232 = vadd.f32 %v230, %v231
    %v233 = vrot.slane %v232, 2
    %v234 = vadd.f32 %v232, %v233
    %v235 = vrot.slane %v234, 1
    %v236 = vadd.f32 %v234, %v235
    %s237 = vtos %v236
    %s238 = ssub.f32 0.0, %s237
    %s239 = smul.f32 %s238, 0.5
    %s240 = sadd.f32 %s207, %s239
    %v241 = vmul.f32 %v135, %v214
    %v242 = vsel %vm52, %v241, 0.0
    %243 = vadd.xlane.f32.xlu0 %v242
    %v244 = vpop.xlane.xlu0 %243
    %v245 = vmul.f32 %v155, %v221
    %v246 = vsub.f32 %v244, %v245
    %v247 = vsel %vm158, %v246, 0.0
    %248 = vadd.xlane.f32.xlu0 %v247
    %v249 = vpop.xlane.xlu0 %248
    %v250 = vrot.slane %v249, 4
    %v251 = vadd.f32 %v249, %v250
    %v252 = vrot.slane %v251, 2
    %v253 = vadd.f32 %v251, %v252
    %v254 = vrot.slane %v253, 1
    %v255 = vadd.f32 %v253, %v254
    %s256 = vtos %v255
    %s257 = ssub.f32 0.0, %s256
    %s258 = smul.f32 %s257, 0.5
    %s259 = sadd.f32 %s240, %s258
    %s260 = scalar_lea.vmem [#allocation3], 6
    %v261 = vld [vmem:[%s260] sm:$0x3]
    %v262 = vmul.f32 %v261, 10.0
    %v263 = vsel %vm52, %v262, -inf
    %264 = vmax.xlane.f32.xlu0 %v263
    %v265 = vpop.xlane.xlu0 %264
    %v266 = vsub.f32 %v262, %v265
    %v267 = vmul.f32 %v266, 1.442695
    %v268 = vpow.pop %v267
    %v269 = vsel %vm52, %v268, 0.0
    %270 = vadd.xlane.f32.xlu0 %v269
    %v271 = vpop.xlane.xlu0 %270
    %v272 = vlog2.pop %v271
    %v273 = vmul.f32 %v272, 0.6931472
    %v274 = vmul.f32 %v134, %v266
    %v275 = vsel %vm52, %v274, 0.0
    %276 = vadd.xlane.f32.xlu0 %v275
    %v277 = vpop.xlane.xlu0 %276
    %v278 = vmul.f32 %v192, %v273
    %v279 = vsub.f32 %v277, %v278
    %v280 = vsel %vm158, %v279, 0.0
    %281 = vadd.xlane.f32.xlu0 %v280
    %v282 = vpop.xlane.xlu0 %281
    %v283 = vrot.slane %v282, 4
    %v284 = vadd.f32 %v282, %v283
    %v285 = vrot.slane %v284, 2
    %v286 = vadd.f32 %v284, %v285
    %v287 = vrot.slane %v286, 1
    %v288 = vadd.f32 %v286, %v287
    %s289 = vtos %v288
    %s290 = ssub.f32 0.0, %s289
    %s291 = smul.f32 %s290, 0.5
    %s292 = sadd.f32 %s259, %s291
    %v293 = vmul.f32 %v135, %v266
    %v294 = vsel %vm52, %v293, 0.0
    %295 = vadd.xlane.f32.xlu0 %v294
    %v296 = vpop.xlane.xlu0 %295
    %v297 = vmul.f32 %v155, %v273
    %v298 = vsub.f32 %v296, %v297
    %v299 = vsel %vm158, %v298, 0.0
    %300 = vadd.xlane.f32.xlu0 %v299
    %v301 = vpop.xlane.xlu0 %300
    %v302 = vrot.slane %v301, 4
    %v303 = vadd.f32 %v301, %v302
    %v304 = vrot.slane %v303, 2
    %v305 = vadd.f32 %v303, %v304
    %v306 = vrot.slane %v305, 1
    %v307 = vadd.f32 %v305, %v306
    %s308 = vtos %v307
    %s309 = ssub.f32 0.0, %s308
    %s310 = smul.f32 %s309, 0.5
    %s311 = sadd.f32 %s292, %s310
    %v312 = vld [vmem:[#allocation8] sm:$0xff]
    %v313 = vstv %s311
    %v314 = vadd.f32 %v312, %v313
    %315 = vst [vmem:[#allocation8] sm:$0xff] %v314
    // Predicated region
    $region22: #{tpu_custom_call.1} parent=1 // pred_check
      _
    $region23: #{tpu_custom_call.1} parent=1 // pred_check_branch
      %317 = sbr.rel (0) target = $region25
    $region24: #{tpu_custom_call.1} parent=1 // pred_region
      %319 = vsyncadd [#allocation5], 0
      %s321 = sshll.u32 [#allocation8], 4
      %s322 = int_to_ptr.vmem [resolvable:$true] %s321
      %s323 = sshll.u32 %s3, 4
      %s324 = int_to_ptr.hbm [resolvable:$true] %s323
      %326 = dma.vmem_to_hbm [thread:$0]  %s322, 128, %s324, [#allocation5]
    $region25: #{tpu_custom_call.1} parent=1 // pred_fallthru
      _
    // Predicated region
    $region26: #{tpu_custom_call.1} parent=1 // pred_check
      _
    $region27: #{tpu_custom_call.1} parent=1 // pred_check_branch
      %328 = sbr.rel (0) target = $region29
    $region28: #{tpu_custom_call.1} parent=1 // pred_region
      %330 = vsyncadd [#allocation10], 0
      %s332 = sshll.u32 [#allocation9], 4
      %s333 = int_to_ptr.vmem [resolvable:$true] %s332
      %s334 = sshll.u32 %s4, 4
      %s335 = int_to_ptr.hbm [resolvable:$true] %s334
      %337 = dma.vmem_to_hbm [thread:$0]  %s333, 16, %s335, [#allocation10]
    $region29: #{tpu_custom_call.1} parent=1 // pred_fallthru
      _
    // Predicated region
    $region30: #{tpu_custom_call.1} parent=1 // pred_check
      _
    $region31: #{tpu_custom_call.1} parent=1 // pred_check_branch
      %339 = sbr.rel (0) target = $region33
    $region32: #{tpu_custom_call.1} parent=1 // pred_region
      %341 = dma.done [#allocation5], 128
    $region33: #{tpu_custom_call.1} parent=1 // pred_fallthru
      _
    // Predicated region
    $region34: #{tpu_custom_call.1} parent=1 // pred_check
      _
    $region35: #{tpu_custom_call.1} parent=1 // pred_check_branch
      %343 = sbr.rel (0) target = $region37
    $region36: #{tpu_custom_call.1} parent=1 // pred_region
      %345 = dma.done [#allocation10], 16
    $region37: #{tpu_custom_call.1} parent=1 // pred_fallthru
      _
    %346 = vsyncpa [#allocation4], 1
    %347 = vsyncpa [#allocation7], 1
    %348 = vsyncpa [#allocation5], 1
    %349 = vsyncpa [#allocation10], 1

</llo_original>
